<compile_context>
chip_gen: v7x
topology: tpu7x:2x2x1
jax: 0.10.0
libtpu: 0.0.40
codegen_flags: <defaults>
</compile_context>

<pallas_src>
import math

import jax
import jax.numpy as jnp
from jax.experimental import pallas as pl
from jax.experimental.pallas import tpu as pltpu

LOG_2PI = math.log(2.0 * math.pi)
_LANES = 128


def _discriminator_kernel(coef_ref, x_ref, o_ref):
    # coef_ref: (3, d) SMEM  -- rows: a_j, b_j, (c_sum at [2, 0])
    # x_ref:    (d, S, 128) VMEM  -- sublane/lane dense sample block
    # o_ref:    (S, 128)    VMEM
    d = x_ref.shape[0]
    x0 = x_ref[0].astype(jnp.float32)
    acc = (coef_ref[0, 0] * x0 + coef_ref[1, 0]) * x0
    for j in range(1, d):                      # d is static -> fully unrolled, pure VPU
        xj = x_ref[j].astype(jnp.float32)
        acc = acc + (coef_ref[0, j] * xj + coef_ref[1, j]) * xj
    logit = acc + coef_ref[2, 0]
    o_ref[...] = jax.nn.sigmoid(logit).astype(o_ref.dtype)


def discriminator_forward_cm(x_cm, mu, log_sigma, noise_to_data=1.0, *,
                             out_dtype=jnp.float32,
                             target_block_bytes=4 * 1024 * 1024):
    """Fast path: x stored component-major, shape (n_comp, n_samples).

    Returns (n_samples,) posterior probabilities p(y=1 | x).
    """
    d, n = x_cm.shape

    mu = mu.astype(jnp.float32).reshape(d)
    log_sigma = log_sigma.astype(jnp.float32).reshape(d)
    ntd = jnp.asarray(noise_to_data, dtype=jnp.float32)

    # Fold log_data - log_noise - log(nu) into sum_j a_j x_j^2 + b_j x_j + c.
    inv_var = jnp.exp(-2.0 * log_sigma)                     # 1 / sigma^2
    a = 0.5 * (1.0 - inv_var)
    b = mu * inv_var
    c_sum = jnp.sum(-0.5 * mu * mu * inv_var - log_sigma) - jnp.log(ntd)
    coef = jnp.zeros((3, d), jnp.float32).at[0].set(a).at[1].set(b).at[2, 0].set(c_sum)

    # Lane-dense view: (d, n) -> (d, R, 128). Contiguous, so the reshape is free.
    n_pad = pl.cdiv(n, _LANES) * _LANES
    if n_pad != n:
        # TODO(synk): padding costs one extra copy of x; keep n a multiple of
        # 128 upstream (or allocate x padded) to avoid it.
        x_cm = jnp.pad(x_cm, ((0, 0), (0, n_pad - n)))
    R = n_pad // _LANES
    x3 = x_cm.reshape(d, R, _LANES)

    # Block sizing: ~target_block_bytes of x per step, sublane count multiple of 8.
    itemsize = x_cm.dtype.itemsize
    raw_rows = target_block_bytes // (d * _LANES * itemsize)
    rows_budget = max(8, (raw_rows // 8) * 8)
    block_rows = R if R <= rows_budget else rows_budget
    grid_n = pl.cdiv(R, block_rows)

    out = pl.pallas_call(
        _discriminator_kernel,
        out_shape=jax.ShapeDtypeStruct((R, _LANES), out_dtype),
        grid_spec=pltpu.PrefetchScalarGridSpec(
            num_scalar_prefetch=0,
            grid=(grid_n,),
            in_specs=[
                pl.BlockSpec(memory_space=pltpu.MemorySpace.SMEM),        # coef (3, d)
                pl.BlockSpec((d, block_rows, _LANES), lambda i: (0, i, 0)),
            ],
            out_specs=pl.BlockSpec((block_rows, _LANES), lambda i: (i, 0)),
        ),
        compiler_params=pltpu.CompilerParams(
            # TODO(synk): on v7x, check xprof that both TensorCores run the grid;
            # if not, switch this axis to pltpu.CORE_PARALLEL.
            dimension_semantics=("parallel",),
            vmem_limit_bytes=32 * 1024 * 1024,   # ~12 MiB double-buffered footprint
        ),
    )(coef, x3)

    out = out.reshape(-1)
    return out if n_pad == n else out[:n]


def discriminator_forward(x, mu, log_sigma, noise_to_data=1.0, **kwargs):
    """Module-compatible interface: x has shape (n_samples, n_comp)."""
    # TODO(synk): this transpose is a full extra HBM read+write of x; store x
    # component-major upstream and call discriminator_forward_cm directly.
    return discriminator_forward_cm(jnp.transpose(x), mu, log_sigma,
                                    noise_to_data, **kwargs)


def _reference(x, mu, log_sigma, noise_to_data=1.0):
    sigma = jnp.exp(log_sigma)
    z = (x - mu[None, :]) / sigma[None, :]
    log_data = jnp.sum(-0.5 * z * z - log_sigma[None, :] - 0.5 * LOG_2PI, axis=-1)
    log_noise = jnp.sum(-0.5 * x * x - 0.5 * LOG_2PI, axis=-1)
    logit = log_data - log_noise - math.log(noise_to_data)
    return jax.nn.sigmoid(logit)


if __name__ == "__main__":
    # Module defaults: n_comp=2, noise_to_data=1
    n_comp = 2
    noise_to_data = 1.0

    key = jax.random.PRNGKey(0)
    k1, k2 = jax.random.split(key)

    # Deterministic "data marginal" parameters (synthetic, not a checkpoint).
    mu = jnp.arange(n_comp, dtype=jnp.float32) * 0.1          # [0.0, 0.1]
    log_sigma = jnp.full((n_comp,), -0.2, dtype=jnp.float32)

    # Case 1: component-major storage (hot path, no transpose anywhere).
    n1 = 1024
    x1_cm = jax.random.normal(k1, (n_comp, n1), dtype=jnp.float32)
    y1 = jax.block_until_ready(
        discriminator_forward_cm(x1_cm, mu, log_sigma, noise_to_data))
    y1_ref = _reference(jnp.transpose(x1_cm), mu, log_sigma, noise_to_data)
    assert y1.shape == (n1,)
    assert jnp.allclose(y1, y1_ref, atol=1e-5, rtol=1e-5), "mismatch vs reference (cm path)"

    # Case 2: small n not a multiple of 128 (pad/tail path) through the
    # module-compatible row-major entry point.
    n2 = 200
    x2 = jax.random.normal(k2, (n2, n_comp), dtype=jnp.float32)
    y2 = jax.block_until_ready(
        discriminator_forward(x2, mu, log_sigma, noise_to_data))
    y2_ref = _reference(x2, mu, log_sigma, noise_to_data)
    assert y2.shape == (n2,)
    assert jnp.allclose(y2, y2_ref, atol=1e-5, rtol=1e-5), "mismatch vs reference (tail path)"

    print("KERNEL_OK")
</pallas_src>

<mosaic_0001>
module attributes {stable_mosaic.version = 11 : i64} {
  func.func @_discriminator_kernel(%arg0: i32, %arg1: memref<3x2xf32, #tpu.memory_space<smem>>, %arg2: memref<2x8x128xf32, #tpu.memory_space<vmem>>, %arg3: memref<8x128xf32, #tpu.memory_space<vmem>>) attributes {dimension_semantics = [#tpu.dimension_semantics<parallel>], iteration_bounds = array<i64: 1>, scalar_prefetch = 0 : i64, scratch_operands = 0 : i64, tpu.core_type = #tpu.core_type<tc>, window_params = [{transform_indices = @transform_0, window_bounds = array<i64: 3, 2>}, {transform_indices = @transform_1, window_bounds = array<i64: 2, 8, 128>}, {transform_indices = @transform_2, window_bounds = array<i64: 8, 128>}]} {
    %c0 = arith.constant 0 : index
    %c0_0 = arith.constant 0 : index
    %c0_1 = arith.constant 0 : index
    %0 = vector.load %arg2[%c0, %c0_0, %c0_1] : memref<2x8x128xf32, #tpu.memory_space<vmem>>, vector<1x8x128xf32>
    %1 = vector.shape_cast %0 : vector<1x8x128xf32> to vector<8x128xf32>
    %c0_2 = arith.constant 0 : index
    %c0_3 = arith.constant 0 : index
    %2 = memref.load %arg1[%c0_2, %c0_3] : memref<3x2xf32, #tpu.memory_space<smem>>
    %3 = vector.broadcast %2 : f32 to vector<8x128xf32>
    %4 = arith.mulf %3, %1 : vector<8x128xf32>
    %c1 = arith.constant 1 : index
    %c0_4 = arith.constant 0 : index
    %5 = memref.load %arg1[%c1, %c0_4] : memref<3x2xf32, #tpu.memory_space<smem>>
    %6 = vector.broadcast %5 : f32 to vector<8x128xf32>
    %7 = arith.addf %4, %6 : vector<8x128xf32>
    %8 = arith.mulf %7, %1 : vector<8x128xf32>
    %c1_5 = arith.constant 1 : index
    %c0_6 = arith.constant 0 : index
    %c0_7 = arith.constant 0 : index
    %9 = vector.load %arg2[%c1_5, %c0_6, %c0_7] : memref<2x8x128xf32, #tpu.memory_space<vmem>>, vector<1x8x128xf32>
    %10 = vector.shape_cast %9 : vector<1x8x128xf32> to vector<8x128xf32>
    %c0_8 = arith.constant 0 : index
    %c1_9 = arith.constant 1 : index
    %11 = memref.load %arg1[%c0_8, %c1_9] : memref<3x2xf32, #tpu.memory_space<smem>>
    %12 = vector.broadcast %11 : f32 to vector<8x128xf32>
    %13 = arith.mulf %12, %10 : vector<8x128xf32>
    %c1_10 = arith.constant 1 : index
    %c1_11 = arith.constant 1 : index
    %14 = memref.load %arg1[%c1_10, %c1_11] : memref<3x2xf32, #tpu.memory_space<smem>>
    %15 = vector.broadcast %14 : f32 to vector<8x128xf32>
    %16 = arith.addf %13, %15 : vector<8x128xf32>
    %17 = arith.mulf %16, %10 : vector<8x128xf32>
    %18 = arith.addf %8, %17 : vector<8x128xf32>
    %c2 = arith.constant 2 : index
    %c0_12 = arith.constant 0 : index
    %19 = memref.load %arg1[%c2, %c0_12] : memref<3x2xf32, #tpu.memory_space<smem>>
    %20 = vector.broadcast %19 : f32 to vector<8x128xf32>
    %21 = arith.addf %18, %20 : vector<8x128xf32>
    %22 = arith.negf %21 : vector<8x128xf32>
    %23 = math.exp %22 : vector<8x128xf32>
    %cst = arith.constant 1.000000e+00 : f32
    %24 = vector.broadcast %cst : f32 to vector<8x128xf32>
    %25 = arith.addf %24, %23 : vector<8x128xf32>
    %26 = arith.divf %24, %25 : vector<8x128xf32>
    %c0_13 = arith.constant 0 : index
    %c0_14 = arith.constant 0 : index
    %27 = vector.load %arg3[%c0_13, %c0_14] : memref<8x128xf32, #tpu.memory_space<vmem>>, vector<8x128xf32>
    tpu.vector_store %arg3[%c0_13, %c0_14], %26 {strides = array<i32>} : memref<8x128xf32, #tpu.memory_space<vmem>>, vector<8x128xf32>,
    return
  }
  func.func @transform_0(%arg0: i32) -> (i32, i32) {
    %c0_i32 = arith.constant 0 : i32
    %c0_i32_0 = arith.constant 0 : i32
    %c0_i32_1 = arith.constant 0 : i32
    return %c0_i32, %c0_i32_0 : i32, i32
  }
  func.func @transform_1(%arg0: i32) -> (i32, i32, i32) {
    %c0_i32 = arith.constant 0 : i32
    %c0_i32_0 = arith.constant 0 : i32
    %c0_i32_1 = arith.constant 0 : i32
    return %c0_i32, %arg0, %c0_i32_0 : i32, i32, i32
  }
  func.func @transform_2(%arg0: i32) -> (i32, i32) {
    %c0_i32 = arith.constant 0 : i32
    %c0_i32_0 = arith.constant 0 : i32
    return %arg0, %c0_i32 : i32, i32
  }
}

</mosaic_0001>

<llo_original>
// kernel: tpu_custom_call.1
$region0: #{tpu_custom_call.1}
  #allocation0 [shape = 'u32[]', space=smem, size = 0x4, offset = 0x4, fixed_abs, tag = 'smem constant byte address 0x4 - core index']
  #allocation1 [shape = 'u32[144,128]{1,0:T(1,128)}', space=vmem, size = 0x12000, scoped, tag = 'internal scratch']
  %s0 = inlined_call_operand.vmem [shape: f32[3,2], index: 0, kind: input, shape index: {}]
  %s1 = inlined_call_operand.hbm [shape: f32[2,8,128], index: 1, kind: input, shape index: {}]
  %s2 = inlined_call_operand.hbm [shape: f32[8,128], index: 2, kind: output, shape index: {}]
  %s3 = sld [smem:[#allocation0]]
  $region26: #{tpu_custom_call.1} parent=0
    _
  %s5 = ssub.s32 1, %s3
  %s6 = scalar_select 0, %s5, %s3
  $region1: #{tpu_custom_call.1} parent=0
    #allocation2 [shape = 'u8[2048]{0}', space=smem, size = 0x800, scoped, tag = 'input window, operand 0, single buffered']
    #allocation3 [shape = 's32[1]{0}', space=sflag, size = 0x4, scoped, tag = 'scoped memory for tpu_custom_call.1']
    #allocation4 [shape = 's32[1]{0}', space=sflag, size = 0x4, scoped, tag = 'scoped memory for tpu_custom_call.1']
    #allocation5 [shape = 's32[1]{0}', space=sflag, size = 0x4, scoped, tag = 'scoped memory for tpu_custom_call.1']
    #allocation6 [shape = 'u8[8192]{0}', space=vmem, size = 0x2000, scoped, tag = 'input window, operand 1, single buffered']
    #allocation7 [shape = 'u8[4096]{0}', space=vmem, size = 0x1000, scoped, tag = 'output window, operand 0, single buffered']
    %7 = vsyncpa [#allocation5], 0
    %8 = vsyncpa [#allocation3], 0
    %9 = vsyncpa [#allocation4], 0
    // Predicated region
    $region2: #{tpu_custom_call.1} parent=1 // pred_check
      _
    $region3: #{tpu_custom_call.1} parent=1 // pred_check_branch
      %11 = sbr.rel (0) target = $region5
    $region4: #{tpu_custom_call.1} parent=1 // pred_region
      %s13 = ssub.s32 64, 64
      %14 = vsyncadd [#allocation5], %s13
      %s16 = sshll.u32 %s0, 4
      %s17 = int_to_ptr.vmem [resolvable:$true] %s16
      %19 = dma.vmem_to_smem %s17, 64, [#allocation2], [#allocation5]
    $region5: #{tpu_custom_call.1} parent=1 // pred_fallthru
      _
    // Predicated region
    $region6: #{tpu_custom_call.1} parent=1 // pred_check
      _
    $region7: #{tpu_custom_call.1} parent=1 // pred_check_branch
      %21 = sbr.rel (0) target = $region9
    $region8: #{tpu_custom_call.1} parent=1 // pred_region
      %s23 = ssub.s32 256, 256
      %24 = vsyncadd [#allocation3], %s23
      %s25 = sshll.u32 [#allocation6], 4
      %s26 = int_to_ptr.vmem [resolvable:$true] %s25
      %31 = dma.hbm_to_vmem [thread:$0]  %s1, 256, %s26, [#allocation3], 128, 128, 8
    $region9: #{tpu_custom_call.1} parent=1 // pred_fallthru
      _
    // Predicated region
    $region10: #{tpu_custom_call.1} parent=1 // pred_check
      _
    $region11: #{tpu_custom_call.1} parent=1 // pred_check_branch
      %33 = sbr.rel (0) target = $region13
    $region12: #{tpu_custom_call.1} parent=1 // pred_region
      %34 = dma.done [#allocation5], 64
    $region13: #{tpu_custom_call.1} parent=1 // pred_fallthru
      _
    // Predicated region
    $region14: #{tpu_custom_call.1} parent=1 // pred_check
      _
    $region15: #{tpu_custom_call.1} parent=1 // pred_check_branch
      %36 = sbr.rel (0) target = $region17
    $region16: #{tpu_custom_call.1} parent=1 // pred_region
      %37 = dma.done [#allocation3], 256
    $region17: #{tpu_custom_call.1} parent=1 // pred_fallthru
      _
    %38 = sfence
    %v39 = vld [vmem:[#allocation6] sm:$0xff]
    %s40 = sld [smem:[#allocation2]]
    %v41 = vstv %s40
    %v42 = vmul.f32 %v41, %v39
    %s43 = sld [smem:[#allocation2 + $0x80]]
    %v44 = vstv %s43
    %v45 = vadd.f32 %v42, %v44
    %v46 = vmul.f32 %v45, %v39
    %s47 = scalar_lea.vmem [#allocation6], 8
    %v48 = vld [vmem:[%s47] sm:$0xff]
    %s49 = sld [smem:[#allocation2 + $0x1]]
    %v50 = vstv %s49
    %v51 = vmul.f32 %v50, %v48
    %s52 = sld [smem:[#allocation2 + $0x81]]
    %v53 = vstv %s52
    %v54 = vadd.f32 %v51, %v53
    %v55 = vmul.f32 %v54, %v48
    %v56 = vadd.f32 %v46, %v55
    %s57 = sld [smem:[#allocation2 + $0x100]]
    %v58 = vstv %s57
    %v59 = vadd.f32 %v56, %v58
    %v60 = vxor.u32 %v59, 2147483648
    %v61 = vmul.f32 %v60, 1.442695
    %v62 = vpow.pop %v61
    %v63 = vadd.f32 %v62, 1.0
    %v64 = vrcp.pop %v63
    %v65 = vmul.f32 1.0, %v64
    %66 = vst [vmem:[#allocation7] sm:$0xff] %v65
    // Predicated region
    $region18: #{tpu_custom_call.1} parent=1 // pred_check
      _
    $region19: #{tpu_custom_call.1} parent=1 // pred_check_branch
      %68 = sbr.rel (0) target = $region21
    $region20: #{tpu_custom_call.1} parent=1 // pred_region
      %s70 = ssub.s32 128, 128
      %71 = vsyncadd [#allocation4], %s70
      %s73 = sshll.u32 [#allocation7], 4
      %s74 = int_to_ptr.vmem [resolvable:$true] %s73
      %76 = dma.vmem_to_hbm [thread:$0]  %s74, 128, %s2, [#allocation4]
    $region21: #{tpu_custom_call.1} parent=1 // pred_fallthru
      _
    // Predicated region
    $region22: #{tpu_custom_call.1} parent=1 // pred_check
      _
    $region23: #{tpu_custom_call.1} parent=1 // pred_check_branch
      %78 = sbr.rel (0) target = $region25
    $region24: #{tpu_custom_call.1} parent=1 // pred_region
      %79 = dma.done [#allocation4], 128
    $region25: #{tpu_custom_call.1} parent=1 // pred_fallthru
      _
    %80 = vsyncpa [#allocation3], 1
    %81 = vsyncpa [#allocation4], 1
    %82 = vsyncpa [#allocation5], 1

</llo_original>
